<compile_context>
chip_gen: v5e
topology: v5e:2x2
jax: 0.10.0
libtpu: 0.0.40
codegen_flags: <defaults>
</compile_context>

<pallas_src>
import functools

import numpy as np

import jax
import jax.numpy as jnp
from jax.experimental import pallas as pl
from jax.experimental.pallas import tpu as pltpu

LEAKY_SLOPE = 0.01  # PyTorch nn.LeakyReLU() default negative_slope


def _round_up(n, m):
    return ((n + m - 1) // m) * m


# -----------------------------------------------------------------------------
# Kernel
# -----------------------------------------------------------------------------
def discriminator_kernel(*refs, n_hidden, matmul_dtype):
    """refs = (lmask, rmask, sel, x, [w_i, b_i]*n_hidden, wcolT, out)."""
    lmask_ref, rmask_ref, sel_ref, x_ref = refs[:4]
    out_ref = refs[-1]                       # (1, B)   f32
    wcolT_ref = refs[-2]                     # (2, C_last_pad) f32
    layer_refs = refs[4:-2]                  # (w_i (3,Cout,Cin), b_i (Cout,1)) pairs

    lm = lmask_ref[...]                      # (1, tile) f32, 1.0 where t == 0
    rm = rmask_ref[...]                      # (1, tile) f32, 1.0 where t == T-1
    lmask = lm > 0.5
    rmask = rm > 0.5

    x = x_ref[...]                           # (C0_pad, tile) f32
    tile = x.shape[1]

    # Hidden layers: 3-tap replicate-pad conv as three accumulating MXU dots.
    for i in range(n_hidden):
        w_ref = layer_refs[2 * i]            # (3, Cout_pad, Cin_pad) matmul_dtype
        b = layer_refs[2 * i + 1][...]       # (Cout_pad, 1) f32
        # Neighbour taps via XLU lane rotation + replicate-pad boundary fixups.
        xl = jnp.where(lmask, x, pltpu.roll(x, shift=1, axis=1))         # x[t-1]
        xr = jnp.where(rmask, x, pltpu.roll(x, shift=tile - 1, axis=1))  # x[t+1]
        y = (jnp.dot(w_ref[0], xl.astype(matmul_dtype),
                     preferred_element_type=jnp.float32)
             + jnp.dot(w_ref[1], x.astype(matmul_dtype),
                       preferred_element_type=jnp.float32)
             + jnp.dot(w_ref[2], xr.astype(matmul_dtype),
                       preferred_element_type=jnp.float32)
             + b)
        x = jnp.where(y > 0, y, LEAKY_SLOPE * y)     # LeakyReLU(0.01), f32

    # Collapsed last conv + feature-sum on the MXU: zz = [vsum; vdiff] @ x.
    zz = jnp.dot(wcolT_ref[...], x, preferred_element_type=jnp.float32)  # (2,tile)
    edge = lm - rm                                                       # (1,tile)
    z = zz[0:1, :] + edge * zz[1:2, :]                                   # (1,tile)

    # Per-batch time reduction via the precomputed selector -> (1, B).
    contrib = jnp.dot(z, sel_ref[...], preferred_element_type=jnp.float32)

    @pl.when(pl.program_id(0) == 0)
    def _():
        out_ref[...] = jnp.zeros_like(out_ref)
    out_ref[...] += contrib


# -----------------------------------------------------------------------------
# Wrapper (plain-JAX glue + pallas_call)
# -----------------------------------------------------------------------------
def make_params(key, in_channels, layer_num, feature_dim):
    """Deterministic synthetic parameters mirroring Discriminator.__init__ shapes.

    Each conv layer: weight stored tap-major as (3, Cout, Cin), bias as (Cout, 1).
    """
    params = []
    cs = in_channels
    for _ in range(layer_num):
        out = cs // 3 * 2
        key, kw, kb = jax.random.split(key, 3)
        w = 0.1 * jax.random.normal(kw, (3, out, cs), jnp.float32)
        b = 0.1 * jax.random.normal(kb, (out, 1), jnp.float32)
        params.append((w, b))
        cs = out
    key, kw, kb = jax.random.split(key, 3)
    w = 0.1 * jax.random.normal(kw, (3, feature_dim, cs), jnp.float32)
    b = 0.1 * jax.random.normal(kb, (feature_dim, 1), jnp.float32)
    params.append((w, b))
    return params


def discriminator_pallas(x_bct, params, *, matmul_dtype=jnp.bfloat16,
                         lane_tile=None):
    """x_bct: (B, C, T) f32 -> final_score (B,) f32."""
    B, C, T = x_bct.shape
    BT = B * T

    # ---- lane tiling over the flattened batch*time axis ----------------------
    # Tiles hold whole batch segments so conv neighbours never cross a tile.
    if lane_tile is None or lane_tile >= BT:
        segs = B
    else:
        segs = max(1, lane_tile // T)
        while B % segs:
            segs -= 1
    tile = segs * T
    num_tiles = B // segs
    # Pad each tile's lane extent to a multiple of 128 (dense vregs, native
    # lane rotate).  Padding columns are inert: masks 0, selector rows 0.
    tile_pad = _round_up(tile, 128)
    bt_pad = num_tiles * tile_pad

    # ---- layout: (B, C, T) -> (C_pad, num_tiles*tile_pad) lane-dense ----------
    c0p = _round_up(C, 8)
    x3 = jnp.transpose(x_bct, (1, 0, 2)).reshape(C, num_tiles, tile)
    x3 = x3.astype(jnp.float32)
    x3 = jnp.pad(x3, ((0, c0p - C), (0, 0), (0, tile_pad - tile)))
    x2 = x3.reshape(c0p, bt_pad)

    # ---- constants hoisted out of the kernel (host numpy, zero runtime cost) --
    col = np.arange(bt_pad)
    off = col % tile_pad
    tile_id = col // tile_pad
    valid = off < tile
    t_in = off % T
    seg = tile_id * segs + off // T
    lmask = (valid & (t_in == 0)).astype(np.float32)[None, :]        # (1, bt_pad)
    rmask = (valid & (t_in == T - 1)).astype(np.float32)[None, :]    # (1, bt_pad)
    sel = (valid[:, None]
           & (seg[:, None] == np.arange(B)[None, :])).astype(np.float32)  # (bt_pad, B)

    # ---- hidden layers: tap-stacked, sublane-padded, matmul-dtype weights -----
    flat = []
    cin_p = c0p
    for (w, b) in params[:-1]:
        _, cout, cin = w.shape
        cout_p = _round_up(cout, 8)
        wp = jnp.zeros((3, cout_p, cin_p), jnp.float32)
        wp = wp.at[:, :cout, :cin].set(w)
        bp = jnp.zeros((cout_p, 1), jnp.float32)
        bp = bp.at[:cout, :].set(b)
        flat.extend([wp.astype(matmul_dtype), bp])
        cin_p = cout_p

    # ---- last conv + sum(dim=1) + sum(dim=-1), algebraically collapsed --------
    #   final[b] = sum_t [ (v0+v1+v2)·x + edge_t*(v0-v2)·x ] + T*sum(b_last),
    #   v_k[c] = sum_o w_last[k, o, c],  edge_t = +1 at t=0, -1 at t=T-1.
    w_last, b_last = params[-1]
    v = jnp.sum(w_last, axis=1)                                  # (3, C_last)
    c_last = v.shape[1]
    wcolT = jnp.zeros((2, cin_p), jnp.float32)
    wcolT = wcolT.at[0, :c_last].set(v[0] + v[1] + v[2])
    wcolT = wcolT.at[1, :c_last].set(v[0] - v[2])
    bias_total = T * jnp.sum(b_last)                             # folded in outside

    n_hidden = len(params) - 1
    kernel = functools.partial(discriminator_kernel, n_hidden=n_hidden,
                               matmul_dtype=matmul_dtype)

    def resident(shape):
        return pl.BlockSpec(shape, lambda *i: (0,) * len(shape))

    in_specs = [
        pl.BlockSpec((1, tile_pad), lambda i: (0, i)),       # lmask
        pl.BlockSpec((1, tile_pad), lambda i: (0, i)),       # rmask
        pl.BlockSpec((tile_pad, B), lambda i: (i, 0)),       # selector
        pl.BlockSpec((c0p, tile_pad), lambda i: (0, i)),     # activations
    ]
    for p in flat:
        in_specs.append(resident(p.shape))                   # weights stay resident
    in_specs.append(resident(wcolT.shape))

    out = pl.pallas_call(
        kernel,
        out_shape=jax.ShapeDtypeStruct((1, B), jnp.float32),
        grid=(num_tiles,),
        in_specs=in_specs,
        out_specs=pl.BlockSpec((1, B), lambda i: (0, 0)),    # accumulated across tiles
        compiler_params=pltpu.CompilerParams(
            dimension_semantics=("arbitrary",)),
    )(lmask, rmask, sel, x2, *flat, wcolT)

    return out[0, :] + bias_total


def discriminator_forward(direction, position, velocity, compute_grad, params,
                          **kwargs):
    """Mirrors Discriminator.forward(direction, position, velocity, compute_grad)."""
    del direction  # unused by the PyTorch forward as well
    # torch.cat((position, velocity), dim=-1).permute(0, 2, 1) -> (B, C, T)
    input_data = jnp.transpose(
        jnp.concatenate([position, velocity], axis=-1), (0, 2, 1))
    final_score = discriminator_pallas(input_data, params, **kwargs)
    grad = None
    # TODO(synk): compute_grad=True (gradient-penalty) path is not implemented.
    return final_score, grad


# -----------------------------------------------------------------------------
# Pure-JAX reference (for in-script validation)
# -----------------------------------------------------------------------------
def ref_forward(x, params):
    for i, (w, b) in enumerate(params):
        wt = jnp.transpose(w, (1, 2, 0))  # (Cout, Cin, 3)
        xp = jnp.pad(x, ((0, 0), (0, 0), (1, 1)), mode='edge')  # ReplicationPad1d
        y = jax.lax.conv_general_dilated(
            xp, wt, window_strides=(1,), padding='VALID',
            dimension_numbers=('NCH', 'OIH', 'NCH'))
        y = y + b[None, :, :]
        if i < len(params) - 1:
            y = jnp.where(y > 0, y, LEAKY_SLOPE * y)
        x = y
    return jnp.sum(x, axis=(1, 2))


# -----------------------------------------------------------------------------
if __name__ == "__main__":
    # Synthetic config consistent with Discriminator.__init__:
    #   current_size = position + velocity = 12
    #   layer_num=2: 12 -> 8 -> 4 channels, then last_layer -> feature_dim=6
    B, T = 2, 16                     # batch, episode_length
    pos_dim, vel_dim = 8, 4
    layer_num = 2
    feature_dim = 6

    key = jax.random.PRNGKey(0)
    kpos, kvel, kparam = jax.random.split(key, 3)
    position = jax.random.normal(kpos, (B, T, pos_dim), jnp.float32)
    velocity = jax.random.normal(kvel, (B, T, vel_dim), jnp.float32)
    params = make_params(kparam, pos_dim + vel_dim, layer_num, feature_dim)

    # Pure-JAX reference.
    x_ref_in = jnp.transpose(jnp.concatenate([position, velocity], axis=-1),
                             (0, 2, 1))
    ref = ref_forward(x_ref_in, params)

    # Exact-arithmetic check of the kernel structure (f32 matmul operands).
    score_f32, _ = discriminator_forward(None, position, velocity, False, params,
                                         matmul_dtype=jnp.float32)
    score_f32 = jax.block_until_ready(score_f32)
    assert score_f32.shape == (B,)
    assert jnp.allclose(score_f32, ref, atol=1e-4, rtol=1e-4), (score_f32, ref)

    # Production path: bf16 MXU operands, f32 accumulation (loose sanity check;
    # exactness is asserted by the f32 path above).
    score_bf16, _ = discriminator_forward(None, position, velocity, False, params)
    score_bf16 = jax.block_until_ready(score_bf16)
    assert score_bf16.shape == (B,)
    assert jnp.allclose(score_bf16, ref, atol=1.5e-1, rtol=5e-2), (score_bf16, ref)

    print("KERNEL_OK")
</pallas_src>

<mosaic_0001>
module attributes {stable_mosaic.version = 11 : i64} {
  func.func @discriminator_kernel(%arg0: i32, %arg1: memref<1x128xf32, #tpu.memory_space<vmem>>, %arg2: memref<1x128xf32, #tpu.memory_space<vmem>>, %arg3: memref<128x2xf32, #tpu.memory_space<vmem>>, %arg4: memref<16x128xf32, #tpu.memory_space<vmem>>, %arg5: memref<3x8x16xf32, #tpu.memory_space<vmem>>, %arg6: memref<8x1xf32, #tpu.memory_space<vmem>>, %arg7: memref<3x8x8xf32, #tpu.memory_space<vmem>>, %arg8: memref<8x1xf32, #tpu.memory_space<vmem>>, %arg9: memref<2x8xf32, #tpu.memory_space<vmem>>, %arg10: memref<1x2xf32, #tpu.memory_space<vmem>>) attributes {dimension_semantics = [#tpu.dimension_semantics<arbitrary>], iteration_bounds = array<i64: 1>, scalar_prefetch = 0 : i64, scratch_operands = 0 : i64, tpu.core_type = #tpu.core_type<tc>, window_params = [{transform_indices = @transform_0, window_bounds = array<i64: 1, 128>}, {transform_indices = @transform_1, window_bounds = array<i64: 1, 128>}, {transform_indices = @transform_2, window_bounds = array<i64: 128, 2>}, {transform_indices = @transform_3, window_bounds = array<i64: 16, 128>}, {pipeline_mode = #tpu.pipeline_mode<synchronous>, transform_indices = @transform_4, window_bounds = array<i64: 3, 8, 16>}, {pipeline_mode = #tpu.pipeline_mode<synchronous>, transform_indices = @transform_5, window_bounds = array<i64: 8, 1>}, {pipeline_mode = #tpu.pipeline_mode<synchronous>, transform_indices = @transform_6, window_bounds = array<i64: 3, 8, 8>}, {pipeline_mode = #tpu.pipeline_mode<synchronous>, transform_indices = @transform_7, window_bounds = array<i64: 8, 1>}, {pipeline_mode = #tpu.pipeline_mode<synchronous>, transform_indices = @transform_8, window_bounds = array<i64: 2, 8>}, {pipeline_mode = #tpu.pipeline_mode<synchronous>, transform_indices = @transform_9, window_bounds = array<i64: 1, 2>}]} {
    %c0 = arith.constant 0 : index
    %c0_0 = arith.constant 0 : index
    %0 = vector.load %arg1[%c0, %c0_0] : memref<1x128xf32, #tpu.memory_space<vmem>>, vector<1x128xf32>
    %c0_1 = arith.constant 0 : index
    %c0_2 = arith.constant 0 : index
    %1 = vector.load %arg2[%c0_1, %c0_2] : memref<1x128xf32, #tpu.memory_space<vmem>>, vector<1x128xf32>
    %cst = arith.constant 5.000000e-01 : f32
    %2 = vector.broadcast %cst : f32 to vector<1x128xf32>
    %3 = arith.cmpf ogt, %0, %2 : vector<1x128xf32>
    %cst_3 = arith.constant 5.000000e-01 : f32
    %4 = vector.broadcast %cst_3 : f32 to vector<1x128xf32>
    %5 = arith.cmpf ogt, %1, %4 : vector<1x128xf32>
    %c0_4 = arith.constant 0 : index
    %c0_5 = arith.constant 0 : index
    %6 = vector.load %arg4[%c0_4, %c0_5] : memref<16x128xf32, #tpu.memory_space<vmem>>, vector<16x128xf32>
    %c0_6 = arith.constant 0 : index
    %c0_7 = arith.constant 0 : index
    %7 = vector.load %arg6[%c0_6, %c0_7] : memref<8x1xf32, #tpu.memory_space<vmem>>, vector<8x1xf32>
    %c1_i32 = arith.constant 1 : i32
    %8 = tpu.dynamic_rotate %6 by %c1_i32 dim 1 : vector<16x128xf32>, i32 -> vector<16x128xf32>
    %9 = vector.shape_cast %3 : vector<1x128xi1> to vector<1x128xi1>
    %10 = vector.broadcast %9 : vector<1x128xi1> to vector<16x128xi1>
    %11 = arith.select %10, %6, %8 : vector<16x128xi1>, vector<16x128xf32>
    %c127_i32 = arith.constant 127 : i32
    %12 = tpu.dynamic_rotate %6 by %c127_i32 dim 1 : vector<16x128xf32>, i32 -> vector<16x128xf32>
    %13 = vector.shape_cast %5 : vector<1x128xi1> to vector<1x128xi1>
    %14 = vector.broadcast %13 : vector<1x128xi1> to vector<16x128xi1>
    %15 = arith.select %14, %6, %12 : vector<16x128xi1>, vector<16x128xf32>
    %c0_8 = arith.constant 0 : index
    %c0_9 = arith.constant 0 : index
    %c0_10 = arith.constant 0 : index
    %16 = vector.load %arg5[%c0_8, %c0_9, %c0_10] : memref<3x8x16xf32, #tpu.memory_space<vmem>>, vector<1x8x16xf32>
    %17 = vector.shape_cast %16 : vector<1x8x16xf32> to vector<8x16xf32>
    %cst_11 = arith.constant dense<0.000000e+00> : vector<8x128xf32>
    %18 = tpu.matmul %17, %11, %cst_11 {dimension_numbers = #tpu.dot_dimension_numbers<[1], [0], [0], [1], [0, 0, 1, 1], [], []>} : vector<8x16xf32>, vector<16x128xf32>, vector<8x128xf32> -> vector<8x128xf32>
    %c1 = arith.constant 1 : index
    %c0_12 = arith.constant 0 : index
    %c0_13 = arith.constant 0 : index
    %19 = vector.load %arg5[%c1, %c0_12, %c0_13] : memref<3x8x16xf32, #tpu.memory_space<vmem>>, vector<1x8x16xf32>
    %20 = vector.shape_cast %19 : vector<1x8x16xf32> to vector<8x16xf32>
    %cst_14 = arith.constant dense<0.000000e+00> : vector<8x128xf32>
    %21 = tpu.matmul %20, %6, %cst_14 {dimension_numbers = #tpu.dot_dimension_numbers<[1], [0], [0], [1], [0, 0, 1, 1], [], []>} : vector<8x16xf32>, vector<16x128xf32>, vector<8x128xf32> -> vector<8x128xf32>
    %22 = arith.addf %18, %21 : vector<8x128xf32>
    %c2 = arith.constant 2 : index
    %c0_15 = arith.constant 0 : index
    %c0_16 = arith.constant 0 : index
    %23 = vector.load %arg5[%c2, %c0_15, %c0_16] : memref<3x8x16xf32, #tpu.memory_space<vmem>>, vector<1x8x16xf32>
    %24 = vector.shape_cast %23 : vector<1x8x16xf32> to vector<8x16xf32>
    %cst_17 = arith.constant dense<0.000000e+00> : vector<8x128xf32>
    %25 = tpu.matmul %24, %15, %cst_17 {dimension_numbers = #tpu.dot_dimension_numbers<[1], [0], [0], [1], [0, 0, 1, 1], [], []>} : vector<8x16xf32>, vector<16x128xf32>, vector<8x128xf32> -> vector<8x128xf32>
    %26 = arith.addf %22, %25 : vector<8x128xf32>
    %27 = vector.broadcast %7 : vector<8x1xf32> to vector<8x128xf32>
    %28 = arith.addf %26, %27 : vector<8x128xf32>
    %cst_18 = arith.constant 0.000000e+00 : f32
    %29 = vector.broadcast %cst_18 : f32 to vector<8x128xf32>
    %30 = arith.cmpf ogt, %28, %29 : vector<8x128xf32>
    %cst_19 = arith.constant 0.00999999977 : f32
    %31 = vector.broadcast %cst_19 : f32 to vector<8x128xf32>
    %32 = arith.mulf %31, %28 : vector<8x128xf32>
    %33 = arith.select %30, %28, %32 : vector<8x128xi1>, vector<8x128xf32>
    %c0_20 = arith.constant 0 : index
    %c0_21 = arith.constant 0 : index
    %34 = vector.load %arg8[%c0_20, %c0_21] : memref<8x1xf32, #tpu.memory_space<vmem>>, vector<8x1xf32>
    %c1_i32_22 = arith.constant 1 : i32
    %35 = tpu.dynamic_rotate %33 by %c1_i32_22 dim 1 : vector<8x128xf32>, i32 -> vector<8x128xf32>
    %36 = vector.shape_cast %3 : vector<1x128xi1> to vector<1x128xi1>
    %37 = vector.broadcast %36 : vector<1x128xi1> to vector<8x128xi1>
    %38 = arith.select %37, %33, %35 : vector<8x128xi1>, vector<8x128xf32>
    %c127_i32_23 = arith.constant 127 : i32
    %39 = tpu.dynamic_rotate %33 by %c127_i32_23 dim 1 : vector<8x128xf32>, i32 -> vector<8x128xf32>
    %40 = vector.shape_cast %5 : vector<1x128xi1> to vector<1x128xi1>
    %41 = vector.broadcast %40 : vector<1x128xi1> to vector<8x128xi1>
    %42 = arith.select %41, %33, %39 : vector<8x128xi1>, vector<8x128xf32>
    %c0_24 = arith.constant 0 : index
    %c0_25 = arith.constant 0 : index
    %c0_26 = arith.constant 0 : index
    %43 = vector.load %arg7[%c0_24, %c0_25, %c0_26] : memref<3x8x8xf32, #tpu.memory_space<vmem>>, vector<1x8x8xf32>
    %44 = vector.shape_cast %43 : vector<1x8x8xf32> to vector<8x8xf32>
    %cst_27 = arith.constant dense<0.000000e+00> : vector<8x128xf32>
    %45 = tpu.matmul %44, %38, %cst_27 {dimension_numbers = #tpu.dot_dimension_numbers<[1], [0], [0], [1], [0, 0, 1, 1], [], []>} : vector<8x8xf32>, vector<8x128xf32>, vector<8x128xf32> -> vector<8x128xf32>
    %c1_28 = arith.constant 1 : index
    %c0_29 = arith.constant 0 : index
    %c0_30 = arith.constant 0 : index
    %46 = vector.load %arg7[%c1_28, %c0_29, %c0_30] : memref<3x8x8xf32, #tpu.memory_space<vmem>>, vector<1x8x8xf32>
    %47 = vector.shape_cast %46 : vector<1x8x8xf32> to vector<8x8xf32>
    %cst_31 = arith.constant dense<0.000000e+00> : vector<8x128xf32>
    %48 = tpu.matmul %47, %33, %cst_31 {dimension_numbers = #tpu.dot_dimension_numbers<[1], [0], [0], [1], [0, 0, 1, 1], [], []>} : vector<8x8xf32>, vector<8x128xf32>, vector<8x128xf32> -> vector<8x128xf32>
    %49 = arith.addf %45, %48 : vector<8x128xf32>
    %c2_32 = arith.constant 2 : index
    %c0_33 = arith.constant 0 : index
    %c0_34 = arith.constant 0 : index
    %50 = vector.load %arg7[%c2_32, %c0_33, %c0_34] : memref<3x8x8xf32, #tpu.memory_space<vmem>>, vector<1x8x8xf32>
    %51 = vector.shape_cast %50 : vector<1x8x8xf32> to vector<8x8xf32>
    %cst_35 = arith.constant dense<0.000000e+00> : vector<8x128xf32>
    %52 = tpu.matmul %51, %42, %cst_35 {dimension_numbers = #tpu.dot_dimension_numbers<[1], [0], [0], [1], [0, 0, 1, 1], [], []>} : vector<8x8xf32>, vector<8x128xf32>, vector<8x128xf32> -> vector<8x128xf32>
    %53 = arith.addf %49, %52 : vector<8x128xf32>
    %54 = vector.broadcast %34 : vector<8x1xf32> to vector<8x128xf32>
    %55 = arith.addf %53, %54 : vector<8x128xf32>
    %cst_36 = arith.constant 0.000000e+00 : f32
    %56 = vector.broadcast %cst_36 : f32 to vector<8x128xf32>
    %57 = arith.cmpf ogt, %55, %56 : vector<8x128xf32>
    %cst_37 = arith.constant 0.00999999977 : f32
    %58 = vector.broadcast %cst_37 : f32 to vector<8x128xf32>
    %59 = arith.mulf %58, %55 : vector<8x128xf32>
    %60 = arith.select %57, %55, %59 : vector<8x128xi1>, vector<8x128xf32>
    %c0_38 = arith.constant 0 : index
    %c0_39 = arith.constant 0 : index
    %61 = vector.load %arg9[%c0_38, %c0_39] : memref<2x8xf32, #tpu.memory_space<vmem>>, vector<2x8xf32>
    %cst_40 = arith.constant dense<0.000000e+00> : vector<2x128xf32>
    %62 = tpu.matmul %61, %60, %cst_40 {dimension_numbers = #tpu.dot_dimension_numbers<[1], [0], [0], [1], [0, 0, 1, 1], [], []>} : vector<2x8xf32>, vector<8x128xf32>, vector<2x128xf32> -> vector<2x128xf32>
    %63 = arith.subf %0, %1 : vector<1x128xf32>
    %64 = vector.extract_strided_slice %62 {offsets = [0, 0], sizes = [1, 128], strides = [1, 1]} : vector<2x128xf32> to vector<1x128xf32>
    %65 = vector.extract_strided_slice %62 {offsets = [1, 0], sizes = [1, 128], strides = [1, 1]} : vector<2x128xf32> to vector<1x128xf32>
    %66 = arith.mulf %63, %65 : vector<1x128xf32>
    %67 = arith.addf %64, %66 : vector<1x128xf32>
    %c0_41 = arith.constant 0 : index
    %c0_42 = arith.constant 0 : index
    %68 = vector.load %arg3[%c0_41, %c0_42] : memref<128x2xf32, #tpu.memory_space<vmem>>, vector<128x2xf32>
    %cst_43 = arith.constant dense<0.000000e+00> : vector<1x2xf32>
    %69 = tpu.matmul %67, %68, %cst_43 {dimension_numbers = #tpu.dot_dimension_numbers<[1], [0], [0], [1], [0, 0, 1, 1], [], []>} : vector<1x128xf32>, vector<128x2xf32>, vector<1x2xf32> -> vector<1x2xf32>
    %c0_i32 = arith.constant 0 : i32
    %70 = arith.cmpi eq, %arg0, %c0_i32 : i32
    %71 = arith.extui %70 : i1 to i32
    %c0_i32_44 = arith.constant 0 : i32
    %72 = arith.cmpi ne, %71, %c0_i32_44 : i32
    scf.if %72 {
      %cst_49 = arith.constant 0.000000e+00 : f32
      %76 = vector.broadcast %cst_49 : f32 to vector<1x2xf32>
      %c0_50 = arith.constant 0 : index
      %c0_51 = arith.constant 0 : index
      %77 = vector.load %arg10[%c0_50, %c0_51] : memref<1x2xf32, #tpu.memory_space<vmem>>, vector<1x2xf32>
      tpu.vector_store %arg10[%c0_50, %c0_51], %76 {strides = array<i32>} : memref<1x2xf32, #tpu.memory_space<vmem>>, vector<1x2xf32>,
    } else {
    }
    %c0_45 = arith.constant 0 : index
    %c0_46 = arith.constant 0 : index
    %73 = vector.load %arg10[%c0_45, %c0_46] : memref<1x2xf32, #tpu.memory_space<vmem>>, vector<1x2xf32>
    %74 = arith.addf %73, %69 : vector<1x2xf32>
    %c0_47 = arith.constant 0 : index
    %c0_48 = arith.constant 0 : index
    %75 = vector.load %arg10[%c0_47, %c0_48] : memref<1x2xf32, #tpu.memory_space<vmem>>, vector<1x2xf32>
    tpu.vector_store %arg10[%c0_47, %c0_48], %74 {strides = array<i32>} : memref<1x2xf32, #tpu.memory_space<vmem>>, vector<1x2xf32>,
    return
  }
  func.func @transform_0(%arg0: i32) -> (i32, i32) {
    %c0_i32 = arith.constant 0 : i32
    %c0_i32_0 = arith.constant 0 : i32
    return %c0_i32, %arg0 : i32, i32
  }
  func.func @transform_1(%arg0: i32) -> (i32, i32) {
    %c0_i32 = arith.constant 0 : i32
    %c0_i32_0 = arith.constant 0 : i32
    return %c0_i32, %arg0 : i32, i32
  }
  func.func @transform_2(%arg0: i32) -> (i32, i32) {
    %c0_i32 = arith.constant 0 : i32
    %c0_i32_0 = arith.constant 0 : i32
    return %arg0, %c0_i32 : i32, i32
  }
  func.func @transform_3(%arg0: i32) -> (i32, i32) {
    %c0_i32 = arith.constant 0 : i32
    %c0_i32_0 = arith.constant 0 : i32
    return %c0_i32, %arg0 : i32, i32
  }
  func.func @transform_4(%arg0: i32) -> (i32, i32, i32) {
    %c0_i32 = arith.constant 0 : i32
    %c0_i32_0 = arith.constant 0 : i32
    %c0_i32_1 = arith.constant 0 : i32
    %c0_i32_2 = arith.constant 0 : i32
    return %c0_i32, %c0_i32_0, %c0_i32_1 : i32, i32, i32
  }
  func.func @transform_5(%arg0: i32) -> (i32, i32) {
    %c0_i32 = arith.constant 0 : i32
    %c0_i32_0 = arith.constant 0 : i32
    %c0_i32_1 = arith.constant 0 : i32
    return %c0_i32, %c0_i32_0 : i32, i32
  }
  func.func @transform_6(%arg0: i32) -> (i32, i32, i32) {
    %c0_i32 = arith.constant 0 : i32
    %c0_i32_0 = arith.constant 0 : i32
    %c0_i32_1 = arith.constant 0 : i32
    %c0_i32_2 = arith.constant 0 : i32
    return %c0_i32, %c0_i32_0, %c0_i32_1 : i32, i32, i32
  }
  func.func @transform_7(%arg0: i32) -> (i32, i32) {
    %c0_i32 = arith.constant 0 : i32
    %c0_i32_0 = arith.constant 0 : i32
    %c0_i32_1 = arith.constant 0 : i32
    return %c0_i32, %c0_i32_0 : i32, i32
  }
  func.func @transform_8(%arg0: i32) -> (i32, i32) {
    %c0_i32 = arith.constant 0 : i32
    %c0_i32_0 = arith.constant 0 : i32
    %c0_i32_1 = arith.constant 0 : i32
    return %c0_i32, %c0_i32_0 : i32, i32
  }
  func.func @transform_9(%arg0: i32) -> (i32, i32) {
    %c0_i32 = arith.constant 0 : i32
    %c0_i32_0 = arith.constant 0 : i32
    %c0_i32_1 = arith.constant 0 : i32
    return %c0_i32, %c0_i32_0 : i32, i32
  }
}

</mosaic_0001>

<llo_original>
// kernel: tpu_custom_call.1
$region0: #{tpu_custom_call.1}
  #allocation0 [shape = 'u32[]', space=smem, size = 0x4, offset = 0x4, fixed_abs, tag = 'smem constant byte address 0x4 - core index']
  #allocation1 [shape = 'u32[72,128]{1,0:T(1,128)}', space=vmem, size = 0x9000, scoped, tag = 'internal scratch']
  %s0 = inlined_call_operand.vmem [shape: f32[1,128], index: 0, kind: input, shape index: {}]
  %s1 = inlined_call_operand.vmem [shape: f32[1,128], index: 1, kind: input, shape index: {}]
  %s2 = inlined_call_operand.vmem [shape: f32[128,2], index: 2, kind: input, shape index: {}]
  %s3 = inlined_call_operand.vmem [shape: f32[16,128], index: 3, kind: input, shape index: {}]
  %s4 = inlined_call_operand.vmem [shape: f32[3,8,16], index: 4, kind: input, shape index: {}]
  %s5 = inlined_call_operand.vmem [shape: f32[8,1], index: 5, kind: input, shape index: {}]
  %s6 = inlined_call_operand.vmem [shape: f32[3,8,8], index: 6, kind: input, shape index: {}]
  %s7 = inlined_call_operand.vmem [shape: f32[8,1], index: 7, kind: input, shape index: {}]
  %s8 = inlined_call_operand.vmem [shape: f32[2,8], index: 8, kind: input, shape index: {}]
  %s9 = inlined_call_operand.hbm [shape: f32[1,2], index: 9, kind: output, shape index: {}]
  %s10 = sld [smem:[#allocation0]]
  $region50: #{tpu_custom_call.1} parent=0
    _
  %s12 = ssub.s32 1, %s10
  %s13 = scalar_select 0, %s12, %s10
  $region1: #{tpu_custom_call.1} parent=0
    #allocation2 [shape = 'u8[512]{0}', space=vmem, size = 0x400, scoped, tag = 'output window, operand 0, single buffered']
    #allocation3 [shape = 's32[1]{0}', space=sflag, size = 0x4, scoped, tag = 'scoped memory for tpu_custom_call.1']
    %14 = vsyncpa [#allocation3], 0
    // Predicated region
    $region2: #{tpu_custom_call.1} parent=1 // pred_check
      _
    $region3: #{tpu_custom_call.1} parent=1 // pred_check_branch
      %16 = sbr.rel (0) target = $region5
    $region4: #{tpu_custom_call.1} parent=1 // pred_region
      _
    $region5: #{tpu_custom_call.1} parent=1 // pred_fallthru
      _
    // Predicated region
    $region6: #{tpu_custom_call.1} parent=1 // pred_check
      _
    $region7: #{tpu_custom_call.1} parent=1 // pred_check_branch
      %18 = sbr.rel (0) target = $region9
    $region8: #{tpu_custom_call.1} parent=1 // pred_region
      _
    $region9: #{tpu_custom_call.1} parent=1 // pred_fallthru
      _
    // Predicated region
    $region10: #{tpu_custom_call.1} parent=1 // pred_check
      _
    $region11: #{tpu_custom_call.1} parent=1 // pred_check_branch
      %20 = sbr.rel (0) target = $region13
    $region12: #{tpu_custom_call.1} parent=1 // pred_region
      _
    $region13: #{tpu_custom_call.1} parent=1 // pred_fallthru
      _
    // Predicated region
    $region14: #{tpu_custom_call.1} parent=1 // pred_check
      _
    $region15: #{tpu_custom_call.1} parent=1 // pred_check_branch
      %22 = sbr.rel (0) target = $region17
    $region16: #{tpu_custom_call.1} parent=1 // pred_region
      _
    $region17: #{tpu_custom_call.1} parent=1 // pred_fallthru
      _
    // Predicated region
    $region18: #{tpu_custom_call.1} parent=1 // pred_check
      _
    $region19: #{tpu_custom_call.1} parent=1 // pred_check_branch
      %24 = sbr.rel (0) target = $region21
    $region20: #{tpu_custom_call.1} parent=1 // pred_region
      _
    $region21: #{tpu_custom_call.1} parent=1 // pred_fallthru
      _
    // Predicated region
    $region22: #{tpu_custom_call.1} parent=1 // pred_check
      _
    $region23: #{tpu_custom_call.1} parent=1 // pred_check_branch
      %26 = sbr.rel (0) target = $region25
    $region24: #{tpu_custom_call.1} parent=1 // pred_region
      _
    $region25: #{tpu_custom_call.1} parent=1 // pred_fallthru
      _
    // Predicated region
    $region26: #{tpu_custom_call.1} parent=1 // pred_check
      _
    $region27: #{tpu_custom_call.1} parent=1 // pred_check_branch
      %28 = sbr.rel (0) target = $region29
    $region28: #{tpu_custom_call.1} parent=1 // pred_region
      _
    $region29: #{tpu_custom_call.1} parent=1 // pred_fallthru
      _
    // Predicated region
    $region30: #{tpu_custom_call.1} parent=1 // pred_check
      _
    $region31: #{tpu_custom_call.1} parent=1 // pred_check_branch
      %30 = sbr.rel (0) target = $region33
    $region32: #{tpu_custom_call.1} parent=1 // pred_region
      _
    $region33: #{tpu_custom_call.1} parent=1 // pred_fallthru
      _
    // Predicated region
    $region34: #{tpu_custom_call.1} parent=1 // pred_check
      _
    $region35: #{tpu_custom_call.1} parent=1 // pred_check_branch
      %32 = sbr.rel (0) target = $region37
    $region36: #{tpu_custom_call.1} parent=1 // pred_region
      _
    $region37: #{tpu_custom_call.1} parent=1 // pred_fallthru
      _
    %v33 = vld [vmem:[%s0] sm:$0x1]
    %v34 = vld [vmem:[%s1] sm:$0x1]
    %vm35 = vcmp.gt.f32.partialorder %v33, 0.5
    %vm36 = vcmp.gt.f32.partialorder %v34, 0.5
    %v37 = vld [vmem:[%s3] sm:$0xff]
    %v38 = vld [vmem:[%s3 + $0x8] sm:$0xff]
    %v39 = vld [vmem:[%s5] sm:$0xff]
    %40 = vrot.lane.b32.xlu0 %v37, 1
    %v41 = vpop.permute.xlu0 %40
    %42 = vrot.lane.b32.xlu0 %v38, 1
    %v43 = vpop.permute.xlu0 %42
    %v44 = vsel %vm35, 1, 0
    %v45 = vperm.slane %v44, 0
    %vm46 = vcmp.eq.s32.totalorder %v45, 1
    %v47 = vsel %vm46, %v37, %v41
    %v48 = vsel %vm46, %v38, %v43
    %49 = vrot.lane.b32.xlu0 %v37, 127
    %v50 = vpop.permute.xlu0 %49
    %51 = vrot.lane.b32.xlu0 %v38, 127
    %v52 = vpop.permute.xlu0 %51
    %v53 = vsel %vm36, 1, 0
    %v54 = vperm.slane %v53, 0
    %vm55 = vcmp.eq.s32.totalorder %v54, 1
    %v56 = vsel %vm55, %v37, %v50
    %v57 = vsel %vm55, %v38, %v52
    %v58 = vld [vmem:[%s4] sm:$0xff]
    %s59 = scalar_lea.vmem %s4, 8
    %v60 = vld [vmem:[%s59] sm:$0xff]
    %vm61 = vcmask 130048
    %v63 = vsel %vm61, %v60, 0
    %65 = vmatpush.msra.mxu0 0.0
    %66 = vmatpush.msra.mxu0 0.0
    %67 = vmatpush.msra.mxu0 0.0
    %68 = vmatpush.msra.mxu0 0.0
    %69 = vmatpush.msra.mxu0 0.0
    %70 = vmatpush.msra.mxu0 0.0
    %71 = vmatpush.msra.mxu0 0.0
    %72 = vmatpush.msra.mxu0 0.0
    %73 = vmatpush.msra.mxu0 0.0
    %74 = vmatpush.msra.mxu0 0.0
    %75 = vmatpush.msra.mxu0 0.0
    %76 = vmatpush.msra.mxu0 0.0
    %77 = vmatpush.msra.mxu0 0.0
    %78 = vmatpush.msra.mxu0 0.0
    %79 = vmatpush.msra.mxu0 %v38
    %80 = vmatpush.msra.mxu0 %v37
    %81 = vmatmul.f32.gmra.mxu0 %v63
    %v82 = vpop.f32.mrf.mxu0
    %v83 = vadd.f32 0.0, %v82
    %84 = vdwg.mxu0
    %v86 = vsel %vm61, %v58, 0
    %88 = vmatpush.msra.mxu0 0.0
    %89 = vmatpush.msra.mxu0 0.0
    %90 = vmatpush.msra.mxu0 0.0
    %91 = vmatpush.msra.mxu0 0.0
    %92 = vmatpush.msra.mxu0 0.0
    %93 = vmatpush.msra.mxu0 0.0
    %94 = vmatpush.msra.mxu0 0.0
    %95 = vmatpush.msra.mxu0 0.0
    %96 = vmatpush.msra.mxu0 0.0
    %97 = vmatpush.msra.mxu0 0.0
    %98 = vmatpush.msra.mxu0 0.0
    %99 = vmatpush.msra.mxu0 0.0
    %100 = vmatpush.msra.mxu0 0.0
    %101 = vmatpush.msra.mxu0 0.0
    %102 = vmatpush.msra.mxu0 %v48
    %103 = vmatpush.msra.mxu0 %v47
    %104 = vmatmul.f32.gmra.mxu0 %v86
    %v105 = vpop.f32.mrf.mxu0
    %v106 = vadd.f32 %v83, %v105
    %107 = vdwg.mxu0
    %s108 = scalar_lea.vmem %s4, 16
    %v109 = vld [vmem:[%s108] sm:$0xff]
    %v111 = vsel %vm61, %v109, 0
    %113 = vmatpush.msra.mxu0 0.0
    %114 = vmatpush.msra.mxu0 0.0
    %115 = vmatpush.msra.mxu0 0.0
    %116 = vmatpush.msra.mxu0 0.0
    %117 = vmatpush.msra.mxu0 0.0
    %118 = vmatpush.msra.mxu0 0.0
    %119 = vmatpush.msra.mxu0 0.0
    %120 = vmatpush.msra.mxu0 0.0
    %121 = vmatpush.msra.mxu0 0.0
    %122 = vmatpush.msra.mxu0 0.0
    %123 = vmatpush.msra.mxu0 0.0
    %124 = vmatpush.msra.mxu0 0.0
    %125 = vmatpush.msra.mxu0 0.0
    %126 = vmatpush.msra.mxu0 0.0
    %127 = vmatpush.msra.mxu0 %v57
    %128 = vmatpush.msra.mxu0 %v56
    %129 = vmatmul.f32.gmra.mxu0 %v111
    %v130 = vpop.f32.mrf.mxu0
    %v131 = vadd.f32 0.0, %v130
    %132 = vdwg.mxu0
    %v133 = vadd.f32 %v106, %v131
    %135 = vset.pattern.permute.xlu0 0
    %136 = vperm.xlu0 %135, %v39
    %v137 = vpop.permute.xlu0 %136
    %v139 = vadd.f32 %v133, %v137
    %vm140 = vcmp.gt.f32.partialorder %v139, 0.0
    %v141 = vmul.f32 %v139, 0.01
    %v142 = vsel %vm140, %v139, %v141
    %v143 = vld [vmem:[%s7] sm:$0xff]
    %144 = vrot.lane.b32.xlu0 %v142, 1
    %v145 = vpop.permute.xlu0 %144
    %v146 = vsel %vm46, %v142, %v145
    %147 = vrot.lane.b32.xlu0 %v142, 127
    %v148 = vpop.permute.xlu0 %147
    %v149 = vsel %vm55, %v142, %v148
    %v150 = vld [vmem:[%s6] sm:$0xff]
    %s151 = scalar_lea.vmem %s6, 8
    %v152 = vld [vmem:[%s151] sm:$0xff]
    %vm153 = vcmask 64512
    %v155 = vsel %vm153, %v152, 0
    %157 = vmatpush.msra.mxu0 0.0
    %158 = vmatpush.msra.mxu0 0.0
    %159 = vmatpush.msra.mxu0 0.0
    %160 = vmatpush.msra.mxu0 0.0
    %161 = vmatpush.msra.mxu0 0.0
    %162 = vmatpush.msra.mxu0 0.0
    %163 = vmatpush.msra.mxu0 0.0
    %164 = vmatpush.msra.mxu0 0.0
    %165 = vmatpush.msra.mxu0 0.0
    %166 = vmatpush.msra.mxu0 0.0
    %167 = vmatpush.msra.mxu0 0.0
    %168 = vmatpush.msra.mxu0 0.0
    %169 = vmatpush.msra.mxu0 0.0
    %170 = vmatpush.msra.mxu0 0.0
    %171 = vmatpush.msra.mxu0 0.0
    %172 = vmatpush.msra.mxu0 %v142
    %173 = vmatmul.f32.gmra.mxu0 %v155
    %v174 = vpop.f32.mrf.mxu0
    %v175 = vadd.f32 0.0, %v174
    %176 = vdwg.mxu0
    %v178 = vsel %vm153, %v150, 0
    %180 = vmatpush.msra.mxu0 0.0
    %181 = vmatpush.msra.mxu0 0.0
    %182 = vmatpush.msra.mxu0 0.0
    %183 = vmatpush.msra.mxu0 0.0
    %184 = vmatpush.msra.mxu0 0.0
    %185 = vmatpush.msra.mxu0 0.0
    %186 = vmatpush.msra.mxu0 0.0
    %187 = vmatpush.msra.mxu0 0.0
    %188 = vmatpush.msra.mxu0 0.0
    %189 = vmatpush.msra.mxu0 0.0
    %190 = vmatpush.msra.mxu0 0.0
    %191 = vmatpush.msra.mxu0 0.0
    %192 = vmatpush.msra.mxu0 0.0
    %193 = vmatpush.msra.mxu0 0.0
    %194 = vmatpush.msra.mxu0 0.0
    %195 = vmatpush.msra.mxu0 %v146
    %196 = vmatmul.f32.gmra.mxu0 %v178
    %v197 = vpop.f32.mrf.mxu0
    %v198 = vadd.f32 %v175, %v197
    %199 = vdwg.mxu0
    %s200 = scalar_lea.vmem %s6, 16
    %v201 = vld [vmem:[%s200] sm:$0xff]
    %v203 = vsel %vm153, %v201, 0
    %205 = vmatpush.msra.mxu0 0.0
    %206 = vmatpush.msra.mxu0 0.0
    %207 = vmatpush.msra.mxu0 0.0
    %208 = vmatpush.msra.mxu0 0.0
    %209 = vmatpush.msra.mxu0 0.0
    %210 = vmatpush.msra.mxu0 0.0
    %211 = vmatpush.msra.mxu0 0.0
    %212 = vmatpush.msra.mxu0 0.0
    %213 = vmatpush.msra.mxu0 0.0
    %214 = vmatpush.msra.mxu0 0.0
    %215 = vmatpush.msra.mxu0 0.0
    %216 = vmatpush.msra.mxu0 0.0
    %217 = vmatpush.msra.mxu0 0.0
    %218 = vmatpush.msra.mxu0 0.0
    %219 = vmatpush.msra.mxu0 0.0
    %220 = vmatpush.msra.mxu0 %v149
    %221 = vmatmul.f32.gmra.mxu0 %v203
    %v222 = vpop.f32.mrf.mxu0
    %v223 = vadd.f32 0.0, %v222
    %224 = vdwg.mxu0
    %v225 = vadd.f32 %v198, %v223
    %227 = vset.pattern.permute.xlu0 0
    %228 = vperm.xlu0 %227, %v143
    %v229 = vpop.permute.xlu0 %228
    %v231 = vadd.f32 %v225, %v229
    %vm232 = vcmp.gt.f32.partialorder %v231, 0.0
    %v233 = vmul.f32 %v231, 0.01
    %v234 = vsel %vm232, %v231, %v233
    %v235 = vld [vmem:[%s8] sm:$0x3]
    %v237 = vsel %vm153, %v235, 0
    %239 = vmatpush.msra.mxu0 0.0
    %240 = vmatpush.msra.mxu0 0.0
    %241 = vmatpush.msra.mxu0 0.0
    %242 = vmatpush.msra.mxu0 0.0
    %243 = vmatpush.msra.mxu0 0.0
    %244 = vmatpush.msra.mxu0 0.0
    %245 = vmatpush.msra.mxu0 0.0
    %246 = vmatpush.msra.mxu0 0.0
    %247 = vmatpush.msra.mxu0 0.0
    %248 = vmatpush.msra.mxu0 0.0
    %249 = vmatpush.msra.mxu0 0.0
    %250 = vmatpush.msra.mxu0 0.0
    %251 = vmatpush.msra.mxu0 0.0
    %252 = vmatpush.msra.mxu0 0.0
    %253 = vmatpush.msra.mxu0 0.0
    %254 = vmatpush.msra.mxu0 %v234
    %255 = vmatmul.f32.gmra.mxu0 %v237
    %v256 = vpop.f32.mrf.mxu0
    %v257 = vadd.f32 0.0, %v256
    %258 = vdwg.mxu0
    %v259 = vsub.f32 %v33, %v34
    %261 = vst [vmem:[#allocation1] sm:$0xff] %v257
    %s262 = scalar_lea.vmem [#allocation1], 1
    %v263 = vld [vmem:[%s262] ss:$9 sm:$0xff]
    %v265 = vmul.f32 %v259, %v263
    %v266 = vadd.f32 %v257, %v265
    %v267 = vld [vmem:[%s2] sm:$0xff]
    %v268 = vld [vmem:[%s2 + $0x8] sm:$0xff]
    %v269 = vld [vmem:[%s2 + $0x10] sm:$0xff]
    %v270 = vld [vmem:[%s2 + $0x18] sm:$0xff]
    %v271 = vld [vmem:[%s2 + $0x20] sm:$0xff]
    %v272 = vld [vmem:[%s2 + $0x28] sm:$0xff]
    %v273 = vld [vmem:[%s2 + $0x30] sm:$0xff]
    %v274 = vld [vmem:[%s2 + $0x38] sm:$0xff]
    %v275 = vld [vmem:[%s2 + $0x40] sm:$0xff]
    %v276 = vld [vmem:[%s2 + $0x48] sm:$0xff]
    %v277 = vld [vmem:[%s2 + $0x50] sm:$0xff]
    %v278 = vld [vmem:[%s2 + $0x58] sm:$0xff]
    %v279 = vld [vmem:[%s2 + $0x60] sm:$0xff]
    %v280 = vld [vmem:[%s2 + $0x68] sm:$0xff]
    %v281 = vld [vmem:[%s2 + $0x70] sm:$0xff]
    %v282 = vld [vmem:[%s2 + $0x78] sm:$0xff]
    %283 = vmatpush.msra.mxu0 %v282
    %284 = vmatpush.msra.mxu0 %v281
    %285 = vmatpush.msra.mxu0 %v280
    %286 = vmatpush.msra.mxu0 %v279
    %287 = vmatpush.msra.mxu0 %v278
    %288 = vmatpush.msra.mxu0 %v277
    %289 = vmatpush.msra.mxu0 %v276
    %290 = vmatpush.msra.mxu0 %v275
    %291 = vmatpush.msra.mxu0 %v274
    %292 = vmatpush.msra.mxu0 %v273
    %293 = vmatpush.msra.mxu0 %v272
    %294 = vmatpush.msra.mxu0 %v271
    %295 = vmatpush.msra.mxu0 %v270
    %296 = vmatpush.msra.mxu0 %v269
    %297 = vmatpush.msra.mxu0 %v268
    %298 = vmatpush.msra.mxu0 %v267
    %299 = vmatmul.f32.gmra.mxu0 %v266
    %v300 = vpop.f32.mrf.mxu0
    %v301 = vadd.f32 0.0, %v300
    %302 = vdwg.mxu0
    %p303 = scmp.eq.s32.totalorder 0, 0
    // Predicated region
    $region38: #{tpu_custom_call.1} parent=1 // pred_check
      %p304 = pneg %p303
    $region39: #{tpu_custom_call.1} parent=1 // pred_check_branch
      %306 = sbr.rel (%p304) target = $region41
    $region40: #{tpu_custom_call.1} parent=1 // pred_region
      %vm307 = vcmask 8192
      %308 = vst.msk [vmem:[#allocation2] sm:$0x1] %vm307, 0.0
    $region41: #{tpu_custom_call.1} parent=1 // pred_fallthru
      _
    %v309 = vld [vmem:[#allocation2] sm:$0x1]
    %v310 = vadd.f32 %v309, %v301
    %vm311 = vcmask 8192
    %312 = vst.msk [vmem:[#allocation2] sm:$0x1] %vm311, %v310
    // Predicated region
    $region42: #{tpu_custom_call.1} parent=1 // pred_check
      _
    $region43: #{tpu_custom_call.1} parent=1 // pred_check_branch
      %314 = sbr.rel (0) target = $region45
    $region44: #{tpu_custom_call.1} parent=1 // pred_region
      %316 = vsyncadd [#allocation3], 0
      %s318 = sshll.u32 [#allocation2], 4
      %s319 = int_to_ptr.vmem [resolvable:$true] %s318
      %s320 = sshll.u32 %s9, 4
      %s321 = int_to_ptr.hbm [resolvable:$true] %s320
      %323 = dma.vmem_to_hbm [thread:$0]  %s319, 16, %s321, [#allocation3]
    $region45: #{tpu_custom_call.1} parent=1 // pred_fallthru
      _
    // Predicated region
    $region46: #{tpu_custom_call.1} parent=1 // pred_check
      _
    $region47: #{tpu_custom_call.1} parent=1 // pred_check_branch
      %325 = sbr.rel (0) target = $region49
    $region48: #{tpu_custom_call.1} parent=1 // pred_region
      %327 = dma.done [#allocation3], 16
    $region49: #{tpu_custom_call.1} parent=1 // pred_fallthru
      _
    %328 = vsyncpa [#allocation3], 1

</llo_original>
